<compile_context>
chip_gen: v5e
topology: v5e:2x2
jax: 0.10.0
libtpu: 0.0.40
codegen_flags: <defaults>
</compile_context>

<pallas_src>
import numpy as np
import jax
import jax.numpy as jnp
from jax.experimental import pallas as pl
from jax.experimental.pallas import tpu as pltpu


# ----------------------------------------------------------------------------
# Parameter construction (mirrors LearnableFilterbank.__init__ deterministically)
# ----------------------------------------------------------------------------
def lin_tri_filter_shape(nfilt=20, nfft=512, sf=16000, lowfreq=0, highfreq=None):
    """Numpy port of the torch lin_tri_filter_shape. Returns (F, nfilt) = (nfft//2+1, nfilt)."""
    highfreq = highfreq or sf / 2
    assert highfreq <= sf / 2, "highfreq is greater than sf/2"
    hzpoints = np.linspace(lowfreq, highfreq, nfilt + 2)
    bin = np.floor((nfft + 1) * hzpoints / sf)
    fbank = np.zeros([nfilt, nfft // 2 + 1], dtype=np.float64)
    for j in range(0, nfilt):
        for i in range(int(bin[j]), int(bin[j + 1])):
            fbank[j, i] = (i - bin[j]) / (bin[j + 1] - bin[j])
        for i in range(int(bin[j + 1]), int(bin[j + 2])):
            fbank[j, i] = (bin[j + 2] - i) / (bin[j + 2] - bin[j + 1])
    return np.transpose(fbank).astype(np.float32)  # (F, nfilt)


def make_params(key, in_chan=2, F=129, nfilt=32, nfft=256, sf=100, lowfreq=0, highfreq=50):
    assert F == nfft // 2 + 1
    S_np = np.zeros((in_chan, F, nfilt), dtype=np.float32)
    tri = lin_tri_filter_shape(nfilt, nfft, sf, lowfreq, highfreq)
    for i in range(in_chan):
        S_np[i] = tri
    S = jnp.asarray(S_np)
    # nn.init.normal_(W): standard normal, deterministic here via PRNGKey
    W = jax.random.normal(key, (in_chan, F, nfilt), dtype=jnp.float32)
    return W, S


# ----------------------------------------------------------------------------
# Pallas kernel
#   grid = (C, ceil(B / tile_b))
#   per grid point: out[b_tile, c] = x[b_tile, c] @ (sigmoid(W[c]) * S[c])
#   Wfb is recomputed each step (tiny; hides under the DMA-bound schedule) so the
#   kernel carries no cross-iteration state and both grid axes can be "parallel".
# ----------------------------------------------------------------------------
def _filterbank_kernel(x_ref, w_ref, s_ref, o_ref):
    # x_ref: (tile_b, T, F)   w_ref/s_ref: (F, D)   o_ref: (tile_b, T, D)
    wfb = jax.nn.sigmoid(w_ref[...]) * s_ref[...]                     # (F, D)

    tb, T, F = x_ref.shape
    D = o_ref.shape[-1]

    # Fold (tile_b, T) into one big MXU M dimension.  When T % 8 == 0 this reshape
    # is layout-free; otherwise Mosaic inserts a sublane relayout that is hidden
    # under the (dominant) x DMA.
    y = jnp.dot(
        x_ref[...].reshape(tb * T, F), wfb, preferred_element_type=jnp.float32
    )
    o_ref[...] = y.reshape(tb, T, D).astype(o_ref.dtype)


def learnable_filterbank(x, W, S, *, rows_target=2048):
    """x: (B, C, T, F); W, S: (C, F, D) -> (B, C, T, D).

    No layout changes in the wrapper: x and out stay in their natural HBM layouts
    and are tiled over (C, batch-tile) directly by the BlockSpecs.
    """
    B, C, T, F = x.shape
    Cw, Fw, D = W.shape
    assert (C, F) == (Cw, Fw)

    # Batch tile so that tile_b * T ~ rows_target MXU rows per grid step.
    # Per-step VMEM (double-buffered x + out tiles) stays ~6-7 MiB at 2048 rows.
    tile_b = int(max(1, min(B, rows_target // max(T, 1))))
    nb = pl.cdiv(B, tile_b)  # Pallas masks the (possibly partial) last batch tile.
    grid = (C, nb)

    x_spec = pl.BlockSpec((tile_b, pl.Squeezed(), T, F), lambda c, b: (b, c, 0, 0))
    w_spec = pl.BlockSpec((pl.Squeezed(), F, D), lambda c, b: (c, 0, 0))
    s_spec = pl.BlockSpec((pl.Squeezed(), F, D), lambda c, b: (c, 0, 0))
    o_spec = pl.BlockSpec((tile_b, pl.Squeezed(), T, D), lambda c, b: (b, c, 0, 0))

    cost = pl.CostEstimate(
        flops=2 * B * C * T * F * D,
        transcendentals=C * F * D,
        bytes_accessed=4 * (B * C * T * F + 2 * C * F * D + B * C * T * D),
    )

    return pl.pallas_call(
        _filterbank_kernel,
        out_shape=jax.ShapeDtypeStruct((B, C, T, D), x.dtype),
        grid_spec=pltpu.PrefetchScalarGridSpec(
            num_scalar_prefetch=0,
            grid=grid,
            in_specs=[x_spec, w_spec, s_spec],
            out_specs=o_spec,
        ),
        compiler_params=pltpu.CompilerParams(
            # No cross-iteration state -> both axes parallel (v7x megacore sharding
            # works even for in_chan == 1).  Near-zero effect on v5e/v6e.
            dimension_semantics=("parallel", "parallel"),
            # Explicit limit so the ~2048-row tile pipelines on v5e's 16 MiB
            # scoped-VMEM default; 32 MiB is safe on v5e/v6e/v7x.
            vmem_limit_bytes=32 * 1024 * 1024,
        ),
        cost_estimate=cost,
    )(x, W, S)


# ----------------------------------------------------------------------------
# Reference (plain JAX) for correctness check
# ----------------------------------------------------------------------------
def learnable_filterbank_ref(x, W, S):
    Wfb = jax.nn.sigmoid(W) * S                    # (C, F, D)
    return jnp.einsum("bctf,cfd->bctd", x, Wfb)


if __name__ == "__main__":
    # Small shapes consistent with module defaults: in_chan=2, F=129, nfilt=32.
    B, C, T = 2, 2, 16
    F, D, NFFT, SF = 129, 32, 256, 100

    key = jax.random.PRNGKey(0)
    k_w, k_x = jax.random.split(key)

    W, S = make_params(k_w, in_chan=C, F=F, nfilt=D, nfft=NFFT, sf=SF,
                       lowfreq=0, highfreq=50)
    x = jax.random.normal(k_x, (B, C, T, F), dtype=jnp.float32)

    out = learnable_filterbank(x, W, S)
    out = jax.block_until_ready(out)

    ref = jax.block_until_ready(learnable_filterbank_ref(x, W, S))
    assert out.shape == (B, C, T, D), out.shape
    np.testing.assert_allclose(np.asarray(out), np.asarray(ref), rtol=1e-5, atol=1e-5)

    print("KERNEL_OK")
</pallas_src>

<mosaic_0001>
module attributes {stable_mosaic.version = 11 : i64} {
  func.func @_filterbank_kernel(%arg0: i32, %arg1: i32, %arg2: memref<2x1x16x129xf32, #tpu.memory_space<vmem>>, %arg3: memref<1x129x32xf32, #tpu.memory_space<vmem>>, %arg4: memref<1x129x32xf32, #tpu.memory_space<vmem>>, %arg5: memref<2x1x16x32xf32, #tpu.memory_space<vmem>>) attributes {dimension_semantics = [#tpu.dimension_semantics<parallel>, #tpu.dimension_semantics<parallel>], iteration_bounds = array<i64: 2, 1>, scalar_prefetch = 0 : i64, scratch_operands = 0 : i64, tpu.core_type = #tpu.core_type<tc>, window_params = [{transform_indices = @transform_0, window_bounds = array<i64: 2, 1, 16, 129>}, {transform_indices = @transform_1, window_bounds = array<i64: 1, 129, 32>}, {transform_indices = @transform_2, window_bounds = array<i64: 1, 129, 32>}, {transform_indices = @transform_3, window_bounds = array<i64: 2, 1, 16, 32>}]} {
    %c0 = arith.constant 0 : index
    %c0_0 = arith.constant 0 : index
    %c0_1 = arith.constant 0 : index
    %0 = vector.load %arg3[%c0, %c0_0, %c0_1] : memref<1x129x32xf32, #tpu.memory_space<vmem>>, vector<1x129x32xf32>
    %1 = vector.shape_cast %0 : vector<1x129x32xf32> to vector<129x32xf32>
    %2 = arith.negf %1 : vector<129x32xf32>
    %3 = math.exp %2 : vector<129x32xf32>
    %cst = arith.constant 1.000000e+00 : f32
    %4 = vector.broadcast %cst : f32 to vector<129x32xf32>
    %5 = arith.addf %4, %3 : vector<129x32xf32>
    %6 = arith.divf %4, %5 : vector<129x32xf32>
    %c0_2 = arith.constant 0 : index
    %c0_3 = arith.constant 0 : index
    %c0_4 = arith.constant 0 : index
    %7 = vector.load %arg4[%c0_2, %c0_3, %c0_4] : memref<1x129x32xf32, #tpu.memory_space<vmem>>, vector<1x129x32xf32>
    %8 = vector.shape_cast %7 : vector<1x129x32xf32> to vector<129x32xf32>
    %9 = arith.mulf %6, %8 : vector<129x32xf32>
    %c0_5 = arith.constant 0 : index
    %c0_6 = arith.constant 0 : index
    %c0_7 = arith.constant 0 : index
    %c0_8 = arith.constant 0 : index
    %10 = vector.load %arg2[%c0_5, %c0_6, %c0_7, %c0_8] : memref<2x1x16x129xf32, #tpu.memory_space<vmem>>, vector<2x1x16x129xf32>
    %11 = vector.shape_cast %10 : vector<2x1x16x129xf32> to vector<2x16x129xf32>
    %12 = vector.shape_cast %11 : vector<2x16x129xf32> to vector<32x129xf32>
    %cst_9 = arith.constant dense<0.000000e+00> : vector<32x32xf32>
    %13 = tpu.matmul %12, %9, %cst_9 {dimension_numbers = #tpu.dot_dimension_numbers<[1], [0], [0], [1], [0, 0, 1, 1], [], []>} : vector<32x129xf32>, vector<129x32xf32>, vector<32x32xf32> -> vector<32x32xf32>
    %14 = vector.shape_cast %13 : vector<32x32xf32> to vector<2x16x32xf32>
    %c0_10 = arith.constant 0 : index
    %c0_11 = arith.constant 0 : index
    %c0_12 = arith.constant 0 : index
    %c0_13 = arith.constant 0 : index
    %15 = vector.load %arg5[%c0_10, %c0_11, %c0_12, %c0_13] : memref<2x1x16x32xf32, #tpu.memory_space<vmem>>, vector<2x1x16x32xf32>
    %16 = vector.shape_cast %15 : vector<2x1x16x32xf32> to vector<2x16x32xf32>
    %17 = vector.shape_cast %14 : vector<2x16x32xf32> to vector<2x1x16x32xf32>
    tpu.vector_store %arg5[%c0_10, %c0_11, %c0_12, %c0_13], %17 {strides = array<i32>} : memref<2x1x16x32xf32, #tpu.memory_space<vmem>>, vector<2x1x16x32xf32>,
    return
  }
  func.func @transform_0(%arg0: i32, %arg1: i32) -> (i32, i32, i32, i32) {
    %c0_i32 = arith.constant 0 : i32
    %c0_i32_0 = arith.constant 0 : i32
    %c0_i32_1 = arith.constant 0 : i32
    return %arg1, %arg0, %c0_i32, %c0_i32_0 : i32, i32, i32, i32
  }
  func.func @transform_1(%arg0: i32, %arg1: i32) -> (i32, i32, i32) {
    %c0_i32 = arith.constant 0 : i32
    %c0_i32_0 = arith.constant 0 : i32
    %c0_i32_1 = arith.constant 0 : i32
    return %arg0, %c0_i32, %c0_i32_0 : i32, i32, i32
  }
  func.func @transform_2(%arg0: i32, %arg1: i32) -> (i32, i32, i32) {
    %c0_i32 = arith.constant 0 : i32
    %c0_i32_0 = arith.constant 0 : i32
    %c0_i32_1 = arith.constant 0 : i32
    return %arg0, %c0_i32, %c0_i32_0 : i32, i32, i32
  }
  func.func @transform_3(%arg0: i32, %arg1: i32) -> (i32, i32, i32, i32) {
    %c0_i32 = arith.constant 0 : i32
    %c0_i32_0 = arith.constant 0 : i32
    %c0_i32_1 = arith.constant 0 : i32
    return %arg1, %arg0, %c0_i32, %c0_i32_0 : i32, i32, i32, i32
  }
}

</mosaic_0001>

<llo_original>
// kernel: tpu_custom_call.1
$region0: #{tpu_custom_call.1}
  #allocation0 [shape = 'u32[]', space=smem, size = 0x4, offset = 0x4, fixed_abs, tag = 'smem constant byte address 0x4 - core index']
  #allocation1 [shape = 'u32[72,128]{1,0:T(1,128)}', space=vmem, size = 0x9000, scoped, tag = 'internal scratch']
  #allocation5 [shape = 's32[]', space=sflag, size = 0x4, offset = 0, fixed_abs, tag = 'sflag constant byte address 0x0 - dummy sync flag']
  %s0 = inlined_call_operand.vmem [shape: f32[2,2,16,129], index: 0, kind: input, shape index: {}]
  %s1 = inlined_call_operand.vmem [shape: f32[2,129,32], index: 1, kind: input, shape index: {}]
  %s2 = inlined_call_operand.vmem [shape: f32[2,129,32], index: 2, kind: input, shape index: {}]
  %s3 = inlined_call_operand.hbm [shape: f32[2,2,16,32], index: 3, kind: output, shape index: {}]
  %s4 = sld [smem:[#allocation0]]
  $region68: #{tpu_custom_call.1} parent=0
    _
  %s6 = ssub.s32 1, %s4
  %s7 = scalar_select 0, %s6, %s4
  $region1: #{tpu_custom_call.1} parent=0
    #allocation2 [shape = 'u8[65536]{0}', space=vmem, size = 0x10000, scoped, tag = 'input window, operand 0']
    #allocation3 [shape = 'u8[32768]{0}', space=vmem, size = 0x8000, scoped, tag = 'output window, operand 0']
    #allocation4 [shape = 's32[2]{0}', space=sflag, size = 0x8, scoped, tag = 'scoped memory for tpu_custom_call.1']
    %8 = vsyncpa [#allocation4], 0
    %s9 = scalar_lea.sflag [#allocation4], 1
    %10 = vsyncpa %s9, 0
    loop: start=0, step=1, limit=4
    $region2: #{tpu_custom_call.1} parent=1 // loop_pre_header
      _
    $region3: #{tpu_custom_call.1} parent=1 // loop_header
      %s12 = sphi 0, %s16
      %p13 = scmp.ge.s32.totalorder %s12, 4
      %s19 = sphi 0, %s31
      %s20 = sphi 0, %s27
      %s21 = sphi 0, %s19
      %s22 = sphi 0, %s20
      %s23 = sphi 0, %s21
      %s24 = sphi 0, %s22
      %s36 = sphi 0, %s38
      %s39 = sphi 0, %s36
      %s40 = sphi 0, %s39
      %s56 = sphi 0, %s40
      %s62 = sphi 0, %s64
      %s65 = sphi 0, %s62
      %s66 = sphi 0, %s65
      %s82 = sphi 0, %s66
      %s88 = sphi 0, %s90
      %s91 = sphi 0, %s88
      %s92 = sphi 0, %s91
      %s108 = sphi 0, %s92
      %s116 = sphi 0, %s118
      %s119 = sphi 0, %s116
      %s120 = sphi 0, %s119
      %s136 = sphi 0, %s120
    $region4: #{tpu_custom_call.1} parent=1 // loop_header_branch
      %15 = sbr.rel (%p13) target = $region8
    $region5: #{tpu_custom_call.1} parent=1 // loop_body
      %s17 = ssub.s32 %s12, 1
      %s18 = ssub.s32 %s12, 2
      %s25 = sadd.s32 1, %s20
      %p26 = scmp.ge.s32.totalorder %s25, 1
      %s27 = scalar_select %p26, 0, %s25
      %s28 = sadd.s32 1, %s19
      %s29 = scalar_select %p26, %s28, %s19
      %p30 = scmp.ge.s32.totalorder %s29, 2
      %s31 = scalar_select %p30, 0, %s29
      %s32 = ssub.s32 %s20, %s27
      %s33 = ssub.s32 %s19, %s31
      %s34 = sor.u32 %s32, %s33
      %p35 = scmp.eq.s32.totalorder %s34, 0
      %s37 = sadd.s32 %s36, 1
      %s38 = scalar_select %p35, %s36, %s37
      %p41 = pneg %p35
      %p42 = scmp.eq.s32.totalorder %s12, 1
      %p43 = por %p41, %p42
      %p44 = scmp.ne.s32.totalorder %s36, %s39
      %p45 = scmp.eq.s32.totalorder %s12, 0
      %p46 = por %p44, %p45
      %p47 = scmp.ne.s32.totalorder %s36, %s39
      %p48 = scmp.eq.s32.totalorder %s17, 1
      %p49 = por %p47, %p48
      %p50 = scmp.ne.s32.totalorder %s39, %s40
      %p51 = scmp.eq.s32.totalorder %s17, 0
      %p52 = por %p50, %p51
      %p53 = scmp.ne.s32.totalorder %s39, %s40
      %p54 = scmp.eq.s32.totalorder %s18, 1
      %p55 = por %p53, %p54
      %p57 = scmp.ne.s32.totalorder %s40, %s56
      %p58 = scmp.eq.s32.totalorder %s18, 0
      %p59 = por %p57, %p58
      %s60 = ssub.s32 %s19, %s31
      %p61 = scmp.eq.s32.totalorder %s60, 0
      %s63 = sadd.s32 %s62, 1
      %s64 = scalar_select %p61, %s62, %s63
      %p67 = pneg %p61
      %p68 = scmp.eq.s32.totalorder %s12, 1
      %p69 = por %p67, %p68
      %p70 = scmp.ne.s32.totalorder %s62, %s65
      %p71 = scmp.eq.s32.totalorder %s12, 0
      %p72 = por %p70, %p71
      %p73 = scmp.ne.s32.totalorder %s62, %s65
      %p74 = scmp.eq.s32.totalorder %s17, 1
      %p75 = por %p73, %p74
      %p76 = scmp.ne.s32.totalorder %s65, %s66
      %p77 = scmp.eq.s32.totalorder %s17, 0
      %p78 = por %p76, %p77
      %p79 = scmp.ne.s32.totalorder %s65, %s66
      %p80 = scmp.eq.s32.totalorder %s18, 1
      %p81 = por %p79, %p80
      %p83 = scmp.ne.s32.totalorder %s66, %s82
      %p84 = scmp.eq.s32.totalorder %s18, 0
      %p85 = por %p83, %p84
      %s86 = ssub.s32 %s19, %s31
      %p87 = scmp.eq.s32.totalorder %s86, 0
      %s89 = sadd.s32 %s88, 1
      %s90 = scalar_select %p87, %s88, %s89
      %p93 = pneg %p87
      %p94 = scmp.eq.s32.totalorder %s12, 1
      %p95 = por %p93, %p94
      %p96 = scmp.ne.s32.totalorder %s88, %s91
      %p97 = scmp.eq.s32.totalorder %s12, 0
      %p98 = por %p96, %p97
      %p99 = scmp.ne.s32.totalorder %s88, %s91
      %p100 = scmp.eq.s32.totalorder %s17, 1
      %p101 = por %p99, %p100
      %p102 = scmp.ne.s32.totalorder %s91, %s92
      %p103 = scmp.eq.s32.totalorder %s17, 0
      %p104 = por %p102, %p103
      %p105 = scmp.ne.s32.totalorder %s91, %s92
      %p106 = scmp.eq.s32.totalorder %s18, 1
      %p107 = por %p105, %p106
      %p109 = scmp.ne.s32.totalorder %s92, %s108
      %p110 = scmp.eq.s32.totalorder %s18, 0
      %p111 = por %p109, %p110
      %s112 = ssub.s32 %s20, %s27
      %s113 = ssub.s32 %s19, %s31
      %s114 = sor.u32 %s112, %s113
      %p115 = scmp.eq.s32.totalorder %s114, 0
      %s117 = sadd.s32 %s116, 1
      %s118 = scalar_select %p115, %s116, %s117
      %p121 = pneg %p115
      %p122 = scmp.eq.s32.totalorder %s12, 1
      %p123 = por %p121, %p122
      %p124 = scmp.ne.s32.totalorder %s116, %s119
      %p125 = scmp.eq.s32.totalorder %s12, 0
      %p126 = por %p124, %p125
      %p127 = scmp.ne.s32.totalorder %s116, %s119
      %p128 = scmp.eq.s32.totalorder %s17, 1
      %p129 = por %p127, %p128
      %p130 = scmp.ne.s32.totalorder %s119, %s120
      %p131 = scmp.eq.s32.totalorder %s17, 0
      %p132 = por %p130, %p131
      %p133 = scmp.ne.s32.totalorder %s119, %s120
      %p134 = scmp.eq.s32.totalorder %s18, 1
      %p135 = por %p133, %p134
      %p137 = scmp.ne.s32.totalorder %s120, %s136
      %p138 = scmp.eq.s32.totalorder %s18, 0
      %p139 = por %p137, %p138
      %p140 = scmp.le.s32.totalorder 1, %s12
      %p141 = scmp.lt.s32.totalorder %s12, 3
      %p142 = pnand %p140, %p141
      %p143 = pneg %p142
      // Predicated region
      $region9: #{tpu_custom_call.1} parent=5 // pred_check
        _
      $region10: #{tpu_custom_call.1} parent=5 // pred_check_branch
        %145 = sbr.rel (%p142) target = $region12
      $region11: #{tpu_custom_call.1} parent=5 // pred_region
        %s146 = ssub.s32 %s12, 1
      $region12: #{tpu_custom_call.1} parent=5 // pred_fallthru
        _
      %p147 = scmp.lt.s32.totalorder %s12, 2
      // Predicated region
      $region13: #{tpu_custom_call.1} parent=5 // pred_check
        %p148 = pneg %p147
      $region14: #{tpu_custom_call.1} parent=5 // pred_check_branch
        %150 = sbr.rel (%p148) target = $region16
      $region15: #{tpu_custom_call.1} parent=5 // pred_region
        // Predicated region
        $region17: #{tpu_custom_call.1} parent=15 // pred_check
          %p151 = pneg %p46
        $region18: #{tpu_custom_call.1} parent=15 // pred_check_branch
          %153 = sbr.rel (%p151) target = $region20
        $region19: #{tpu_custom_call.1} parent=15 // pred_region
          %s154 = sand.u32 %s36, 1
          %s155 = sand.u32 %s36, 1
          %s156 = smul.addr %s155, 64
          %s157 = scalar_lea.vmem [#allocation2], %s156
          %s158 = smul.u32 2, %s20
          %s159 = smul.addr %s19, 4
          %s160 = smul.addr %s158, 8
          %s161 = sadd.s32 %s159, %s160
          %s162 = smul.addr %s161, 8
          %s163 = scalar_lea.vmem %s0, %s162
          // Predicated region
          $region21: #{tpu_custom_call.1} parent=19 // pred_check
            _
          $region22: #{tpu_custom_call.1} parent=19 // pred_check_branch
            %165 = sbr.rel (0) target = $region24
          $region23: #{tpu_custom_call.1} parent=19 // pred_region
            // Predicated region
            $region25: #{tpu_custom_call.1} parent=23 // pred_check
              _
            $region26: #{tpu_custom_call.1} parent=23 // pred_check_branch
              %167 = sbr.rel (0) target = $region28
            $region27: #{tpu_custom_call.1} parent=23 // pred_region
              loop: start=0, step=1, limit=1
              $region29: #{tpu_custom_call.1} parent=27 // loop_pre_header
                _
              $region30: #{tpu_custom_call.1} parent=27 // loop_header
                %s169 = sphi 0, %s173
                %p170 = scmp.ge.s32.totalorder %s169, 1
                %s174 = sphi %s163, %s163
                %s175 = sphi %s157, %s157
              $region31: #{tpu_custom_call.1} parent=27 // loop_header_branch
                %172 = sbr.rel (%p170) target = $region35
              $region32: #{tpu_custom_call.1} parent=27 // loop_body
                %v176 = vld [vmem:[%s174] sm:$0xff]
                %177 = vst [vmem:[%s175] sm:$0xff] %v176
                %v178 = vld [vmem:[%s174 + $0x8] sm:$0xff]
                %179 = vst [vmem:[%s175 + $0x8] sm:$0xff] %v178
                %v180 = vld [vmem:[%s174 + $0x10] sm:$0xff]
                %181 = vst [vmem:[%s175 + $0x10] sm:$0xff] %v180
                %v182 = vld [vmem:[%s174 + $0x18] sm:$0xff]
                %183 = vst [vmem:[%s175 + $0x18] sm:$0xff] %v182
                %v184 = vld [vmem:[%s174 + $0x40] sm:$0xff]
                %185 = vst [vmem:[%s175 + $0x20] sm:$0xff] %v184
                %v186 = vld [vmem:[%s174 + $0x48] sm:$0xff]
                %187 = vst [vmem:[%s175 + $0x28] sm:$0xff] %v186
                %v188 = vld [vmem:[%s174 + $0x50] sm:$0xff]
                %189 = vst [vmem:[%s175 + $0x30] sm:$0xff] %v188
                %v190 = vld [vmem:[%s174 + $0x58] sm:$0xff]
                %191 = vst [vmem:[%s175 + $0x38] sm:$0xff] %v190
              $region33: #{tpu_custom_call.1} parent=27 // loop_footer
                %s173 = sadd.s32 1, %s169
              $region34: #{tpu_custom_call.1} parent=27 // loop_footer_branch
                %168 = sbr.rel target = $region30
              $region35: #{tpu_custom_call.1} parent=27 // loop_exit
                _
            $region28: #{tpu_custom_call.1} parent=23 // pred_fallthru
              _
            // Predicated region
            $region36: #{tpu_custom_call.1} parent=23 // pred_check
              _
            $region37: #{tpu_custom_call.1} parent=23 // pred_check_branch
              %193 = sbr.rel target = $region39
            $region38: #{tpu_custom_call.1} parent=23 // pred_region
              _
            $region39: #{tpu_custom_call.1} parent=23 // pred_fallthru
              _
          $region24: #{tpu_custom_call.1} parent=19 // pred_fallthru
            _
          %194 = vnop
        $region20: #{tpu_custom_call.1} parent=15 // pred_fallthru
          _
        // Predicated region
        $region40: #{tpu_custom_call.1} parent=15 // pred_check
          %p195 = pneg %p72
        $region41: #{tpu_custom_call.1} parent=15 // pred_check_branch
          %197 = sbr.rel (%p195) target = $region43
        $region42: #{tpu_custom_call.1} parent=15 // pred_region
          %p198 = scmp.lt.s32.totalorder %s19, 1
          %s199 = scalar_select %p198, %s19, 1
          %s200 = smul.addr %s199, 17
          %s201 = smul.addr %s200, 8
          %s202 = scalar_lea.vmem %s1, %s201
        $region43: #{tpu_custom_call.1} parent=15 // pred_fallthru
          _
        // Predicated region
        $region44: #{tpu_custom_call.1} parent=15 // pred_check
          %p203 = pneg %p98
        $region45: #{tpu_custom_call.1} parent=15 // pred_check_branch
          %205 = sbr.rel (%p203) target = $region47
        $region46: #{tpu_custom_call.1} parent=15 // pred_region
          %p206 = scmp.lt.s32.totalorder %s19, 1
          %s207 = scalar_select %p206, %s19, 1
          %s208 = smul.addr %s207, 17
          %s209 = smul.addr %s208, 8
          %s210 = scalar_lea.vmem %s2, %s209
        $region47: #{tpu_custom_call.1} parent=15 // pred_fallthru
          _
      $region16: #{tpu_custom_call.1} parent=5 // pred_fallthru
        _
      %p211 = scmp.le.s32.totalorder 1, %s12
      %p212 = scmp.lt.s32.totalorder %s12, 3
      %p213 = pnand %p211, %p212
      %p214 = pneg %p213
      // Predicated region
      $region48: #{tpu_custom_call.1} parent=5 // pred_check
        _
      $region49: #{tpu_custom_call.1} parent=5 // pred_check_branch
        %216 = sbr.rel (%p213) target = $region51
      $region50: #{tpu_custom_call.1} parent=5 // pred_region
        %s217 = ssub.s32 %s12, 1
        %s218 = sand.u32 %s39, 1
        %s219 = sand.u32 %s39, 1
        %s220 = smul.addr %s219, 64
        %s221 = scalar_lea.vmem [#allocation2], %s220
        // Predicated region
        $region52: #{tpu_custom_call.1} parent=50 // pred_check
          %p222 = pneg %p52
        $region53: #{tpu_custom_call.1} parent=50 // pred_check_branch
          %224 = sbr.rel (%p222) target = $region55
        $region54: #{tpu_custom_call.1} parent=50 // pred_region
          _
        $region55: #{tpu_custom_call.1} parent=50 // pred_fallthru
          _
        %s225 = sand.u32 %s39, 1
        %s226 = sand.u32 %s39, 1
        %s227 = smul.addr %s226, 64
        %s228 = scalar_lea.vmem [#allocation2], %s227
        %p229 = pneg %p52
        %p230 = pneg %p49
        %p231 = scmp.lt.s32.totalorder %s21, 1
        %s232 = scalar_select %p231, %s21, 1
        %s233 = smul.addr %s232, 17
        %s234 = smul.addr %s233, 8
        %s235 = scalar_lea.vmem %s1, %s234
        %p236 = pneg %p78
        %p237 = pneg %p75
        %p238 = scmp.lt.s32.totalorder %s21, 1
        %s239 = scalar_select %p238, %s21, 1
        %s240 = smul.addr %s239, 17
        %s241 = smul.addr %s240, 8
        %s242 = scalar_lea.vmem %s2, %s241
        %p243 = pneg %p104
        %p244 = pneg %p101
        %p245 = pneg %p132
        %p246 = pneg %p129
        %s247 = sand.u32 %s119, 1
        %s248 = scalar_lea.sflag [#allocation4], %s247
        %s249 = sand.u32 %s119, 1
        %s250 = smul.addr %s249, 32
        %s251 = scalar_lea.vmem [#allocation3], %s250
        %s252 = smul.u32 2, %s22
        %p253 = scmp.lt.s32.totalorder %s21, 1
        %s254 = scalar_select %p253, %s21, 1
        %s255 = smul.addr %s254, 17
        %s256 = smul.addr %s255, 8
        %s257 = scalar_lea.vmem %s1, %s256
        %p258 = scmp.lt.s32.totalorder %s21, 1
        %s259 = scalar_select %p258, %s21, 1
        %s260 = smul.addr %s259, 17
        %s261 = smul.addr %s260, 8
        %s262 = scalar_lea.vmem %s2, %s261
        %s263 = smul.u32 2, %s22
        %v264 = vld [vmem:[%s257] sm:$0xff]
        %v265 = vld [vmem:[%s257 + $0x8] sm:$0xff]
        %v266 = vld [vmem:[%s257 + $0x10] sm:$0xff]
        %v267 = vld [vmem:[%s257 + $0x18] sm:$0xff]
        %v268 = vld [vmem:[%s257 + $0x20] sm:$0xff]
        %v269 = vld [vmem:[%s257 + $0x28] sm:$0xff]
        %v270 = vld [vmem:[%s257 + $0x30] sm:$0xff]
        %v271 = vld [vmem:[%s257 + $0x38] sm:$0xff]
        %v272 = vld [vmem:[%s257 + $0x40] sm:$0xff]
        %v273 = vld [vmem:[%s257 + $0x48] sm:$0xff]
        %v274 = vld [vmem:[%s257 + $0x50] sm:$0xff]
        %v275 = vld [vmem:[%s257 + $0x58] sm:$0xff]
        %v276 = vld [vmem:[%s257 + $0x60] sm:$0xff]
        %v277 = vld [vmem:[%s257 + $0x68] sm:$0xff]
        %v278 = vld [vmem:[%s257 + $0x70] sm:$0xff]
        %v279 = vld [vmem:[%s257 + $0x78] sm:$0xff]
        %v280 = vld [vmem:[%s257 + $0x80] sm:$0x1]
        %v281 = vxor.u32 %v264, 2147483648
        %v282 = vxor.u32 %v265, 2147483648
        %v283 = vxor.u32 %v266, 2147483648
        %v284 = vxor.u32 %v267, 2147483648
        %v285 = vxor.u32 %v268, 2147483648
        %v286 = vxor.u32 %v269, 2147483648
        %v287 = vxor.u32 %v270, 2147483648
        %v288 = vxor.u32 %v271, 2147483648
        %v289 = vxor.u32 %v272, 2147483648
        %v290 = vxor.u32 %v273, 2147483648
        %v291 = vxor.u32 %v274, 2147483648
        %v292 = vxor.u32 %v275, 2147483648
        %v293 = vxor.u32 %v276, 2147483648
        %v294 = vxor.u32 %v277, 2147483648
        %v295 = vxor.u32 %v278, 2147483648
        %v296 = vxor.u32 %v279, 2147483648
        %v297 = vxor.u32 %v280, 2147483648
        %v298 = vmul.f32 %v281, 1.442695
        %v299 = vpow.pop %v298
        %v300 = vmul.f32 %v282, 1.442695
        %v301 = vpow.pop %v300
        %v302 = vmul.f32 %v283, 1.442695
        %v303 = vpow.pop %v302
        %v304 = vmul.f32 %v284, 1.442695
        %v305 = vpow.pop %v304
        %v306 = vmul.f32 %v285, 1.442695
        %v307 = vpow.pop %v306
        %v308 = vmul.f32 %v286, 1.442695
        %v309 = vpow.pop %v308
        %v310 = vmul.f32 %v287, 1.442695
        %v311 = vpow.pop %v310
        %v312 = vmul.f32 %v288, 1.442695
        %v313 = vpow.pop %v312
        %v314 = vmul.f32 %v289, 1.442695
        %v315 = vpow.pop %v314
        %v316 = vmul.f32 %v290, 1.442695
        %v317 = vpow.pop %v316
        %v318 = vmul.f32 %v291, 1.442695
        %v319 = vpow.pop %v318
        %v320 = vmul.f32 %v292, 1.442695
        %v321 = vpow.pop %v320
        %v322 = vmul.f32 %v293, 1.442695
        %v323 = vpow.pop %v322
        %v324 = vmul.f32 %v294, 1.442695
        %v325 = vpow.pop %v324
        %v326 = vmul.f32 %v295, 1.442695
        %v327 = vpow.pop %v326
        %v328 = vmul.f32 %v296, 1.442695
        %v329 = vpow.pop %v328
        %v330 = vmul.f32 %v297, 1.442695
        %v331 = vpow.pop %v330
        %v332 = vadd.f32 %v299, 1.0
        %v333 = vadd.f32 %v301, 1.0
        %v334 = vadd.f32 %v303, 1.0
        %v335 = vadd.f32 %v305, 1.0
        %v336 = vadd.f32 %v307, 1.0
        %v337 = vadd.f32 %v309, 1.0
        %v338 = vadd.f32 %v311, 1.0
        %v339 = vadd.f32 %v313, 1.0
        %v340 = vadd.f32 %v315, 1.0
        %v341 = vadd.f32 %v317, 1.0
        %v342 = vadd.f32 %v319, 1.0
        %v343 = vadd.f32 %v321, 1.0
        %v344 = vadd.f32 %v323, 1.0
        %v345 = vadd.f32 %v325, 1.0
        %v346 = vadd.f32 %v327, 1.0
        %v347 = vadd.f32 %v329, 1.0
        %v348 = vadd.f32 %v331, 1.0
        %v349 = vrcp.pop %v332
        %v350 = vmul.f32 %v332, %v349
        %v351 = vsub.f32 1.0, %v350
        %v352 = vmul.f32 %v349, %v351
        %v353 = vadd.f32 %v349, %v352
        %vm354 = vweird.f32 %v332
        %vm355 = vweird.f32 %v349
        %vm356 = vmor %vm354, %vm355
        %v357 = vsel %vm356, %v349, %v353
        %v358 = vand.u32 2147483647, %v332
        %vm359 = vcmp.eq.f32.partialorder %v358, 8.507059e+37
        %v360 = vand.u32 %v332, 2147483648
        %v361 = vor.u32 1.1754944e-38, %v360
        %v362 = vsel %vm359, %v361, %v357
        %v363 = vmul.f32 1.0, %v362
        %v364 = vrcp.pop %v333
        %v365 = vmul.f32 %v333, %v364
        %v366 = vsub.f32 1.0, %v365
        %v367 = vmul.f32 %v364, %v366
        %v368 = vadd.f32 %v364, %v367
        %vm369 = vweird.f32 %v333
        %vm370 = vweird.f32 %v364
        %vm371 = vmor %vm369, %vm370
        %v372 = vsel %vm371, %v364, %v368
        %v373 = vand.u32 2147483647, %v333
        %vm374 = vcmp.eq.f32.partialorder %v373, 8.507059e+37
        %v375 = vand.u32 %v333, 2147483648
        %v376 = vor.u32 1.1754944e-38, %v375
        %v377 = vsel %vm374, %v376, %v372
        %v378 = vmul.f32 1.0, %v377
        %v379 = vrcp.pop %v334
        %v380 = vmul.f32 %v334, %v379
        %v381 = vsub.f32 1.0, %v380
        %v382 = vmul.f32 %v379, %v381
        %v383 = vadd.f32 %v379, %v382
        %vm384 = vweird.f32 %v334
        %vm385 = vweird.f32 %v379
        %vm386 = vmor %vm384, %vm385
        %v387 = vsel %vm386, %v379, %v383
        %v388 = vand.u32 2147483647, %v334
        %vm389 = vcmp.eq.f32.partialorder %v388, 8.507059e+37
        %v390 = vand.u32 %v334, 2147483648
        %v391 = vor.u32 1.1754944e-38, %v390
        %v392 = vsel %vm389, %v391, %v387
        %v393 = vmul.f32 1.0, %v392
        %v394 = vrcp.pop %v335
        %v395 = vmul.f32 %v335, %v394
        %v396 = vsub.f32 1.0, %v395
        %v397 = vmul.f32 %v394, %v396
        %v398 = vadd.f32 %v394, %v397
        %vm399 = vweird.f32 %v335
        %vm400 = vweird.f32 %v394
        %vm401 = vmor %vm399, %vm400
        %v402 = vsel %vm401, %v394, %v398
        %v403 = vand.u32 2147483647, %v335
        %vm404 = vcmp.eq.f32.partialorder %v403, 8.507059e+37
        %v405 = vand.u32 %v335, 2147483648
        %v406 = vor.u32 1.1754944e-38, %v405
        %v407 = vsel %vm404, %v406, %v402
        %v408 = vmul.f32 1.0, %v407
        %v409 = vrcp.pop %v336
        %v410 = vmul.f32 %v336, %v409
        %v411 = vsub.f32 1.0, %v410
        %v412 = vmul.f32 %v409, %v411
        %v413 = vadd.f32 %v409, %v412
        %vm414 = vweird.f32 %v336
        %vm415 = vweird.f32 %v409
        %vm416 = vmor %vm414, %vm415
        %v417 = vsel %vm416, %v409, %v413
        %v418 = vand.u32 2147483647, %v336
        %vm419 = vcmp.eq.f32.partialorder %v418, 8.507059e+37
        %v420 = vand.u32 %v336, 2147483648
        %v421 = vor.u32 1.1754944e-38, %v420
        %v422 = vsel %vm419, %v421, %v417
        %v423 = vmul.f32 1.0, %v422
        %v424 = vrcp.pop %v337
        %v425 = vmul.f32 %v337, %v424
        %v426 = vsub.f32 1.0, %v425
        %v427 = vmul.f32 %v424, %v426
        %v428 = vadd.f32 %v424, %v427
        %vm429 = vweird.f32 %v337
        %vm430 = vweird.f32 %v424
        %vm431 = vmor %vm429, %vm430
        %v432 = vsel %vm431, %v424, %v428
        %v433 = vand.u32 2147483647, %v337
        %vm434 = vcmp.eq.f32.partialorder %v433, 8.507059e+37
        %v435 = vand.u32 %v337, 2147483648
        %v436 = vor.u32 1.1754944e-38, %v435
        %v437 = vsel %vm434, %v436, %v432
        %v438 = vmul.f32 1.0, %v437
        %v439 = vrcp.pop %v338
        %v440 = vmul.f32 %v338, %v439
        %v441 = vsub.f32 1.0, %v440
        %v442 = vmul.f32 %v439, %v441
        %v443 = vadd.f32 %v439, %v442
        %vm444 = vweird.f32 %v338
        %vm445 = vweird.f32 %v439
        %vm446 = vmor %vm444, %vm445
        %v447 = vsel %vm446, %v439, %v443
        %v448 = vand.u32 2147483647, %v338
        %vm449 = vcmp.eq.f32.partialorder %v448, 8.507059e+37
        %v450 = vand.u32 %v338, 2147483648
        %v451 = vor.u32 1.1754944e-38, %v450
        %v452 = vsel %vm449, %v451, %v447
        %v453 = vmul.f32 1.0, %v452
        %v454 = vrcp.pop %v339
        %v455 = vmul.f32 %v339, %v454
        %v456 = vsub.f32 1.0, %v455
        %v457 = vmul.f32 %v454, %v456
        %v458 = vadd.f32 %v454, %v457
        %vm459 = vweird.f32 %v339
        %vm460 = vweird.f32 %v454
        %vm461 = vmor %vm459, %vm460
        %v462 = vsel %vm461, %v454, %v458
        %v463 = vand.u32 2147483647, %v339
        %vm464 = vcmp.eq.f32.partialorder %v463, 8.507059e+37
        %v465 = vand.u32 %v339, 2147483648
        %v466 = vor.u32 1.1754944e-38, %v465
        %v467 = vsel %vm464, %v466, %v462
        %v468 = vmul.f32 1.0, %v467
        %v469 = vrcp.pop %v340
        %v470 = vmul.f32 %v340, %v469
        %v471 = vsub.f32 1.0, %v470
        %v472 = vmul.f32 %v469, %v471
        %v473 = vadd.f32 %v469, %v472
        %vm474 = vweird.f32 %v340
        %vm475 = vweird.f32 %v469
        %vm476 = vmor %vm474, %vm475
        %v477 = vsel %vm476, %v469, %v473
        %v478 = vand.u32 2147483647, %v340
        %vm479 = vcmp.eq.f32.partialorder %v478, 8.507059e+37
        %v480 = vand.u32 %v340, 2147483648
        %v481 = vor.u32 1.1754944e-38, %v480
        %v482 = vsel %vm479, %v481, %v477
        %v483 = vmul.f32 1.0, %v482
        %v484 = vrcp.pop %v341
        %v485 = vmul.f32 %v341, %v484
        %v486 = vsub.f32 1.0, %v485
        %v487 = vmul.f32 %v484, %v486
        %v488 = vadd.f32 %v484, %v487
        %vm489 = vweird.f32 %v341
        %vm490 = vweird.f32 %v484
        %vm491 = vmor %vm489, %vm490
        %v492 = vsel %vm491, %v484, %v488
        %v493 = vand.u32 2147483647, %v341
        %vm494 = vcmp.eq.f32.partialorder %v493, 8.507059e+37
        %v495 = vand.u32 %v341, 2147483648
        %v496 = vor.u32 1.1754944e-38, %v495
        %v497 = vsel %vm494, %v496, %v492
        %v498 = vmul.f32 1.0, %v497
        %v499 = vrcp.pop %v342
        %v500 = vmul.f32 %v342, %v499
        %v501 = vsub.f32 1.0, %v500
        %v502 = vmul.f32 %v499, %v501
        %v503 = vadd.f32 %v499, %v502
        %vm504 = vweird.f32 %v342
        %vm505 = vweird.f32 %v499
        %vm506 = vmor %vm504, %vm505
        %v507 = vsel %vm506, %v499, %v503
        %v508 = vand.u32 2147483647, %v342
        %vm509 = vcmp.eq.f32.partialorder %v508, 8.507059e+37
        %v510 = vand.u32 %v342, 2147483648
        %v511 = vor.u32 1.1754944e-38, %v510
        %v512 = vsel %vm509, %v511, %v507
        %v513 = vmul.f32 1.0, %v512
        %v514 = vrcp.pop %v343
        %v515 = vmul.f32 %v343, %v514
        %v516 = vsub.f32 1.0, %v515
        %v517 = vmul.f32 %v514, %v516
        %v518 = vadd.f32 %v514, %v517
        %vm519 = vweird.f32 %v343
        %vm520 = vweird.f32 %v514
        %vm521 = vmor %vm519, %vm520
        %v522 = vsel %vm521, %v514, %v518
        %v523 = vand.u32 2147483647, %v343
        %vm524 = vcmp.eq.f32.partialorder %v523, 8.507059e+37
        %v525 = vand.u32 %v343, 2147483648
        %v526 = vor.u32 1.1754944e-38, %v525
        %v527 = vsel %vm524, %v526, %v522
        %v528 = vmul.f32 1.0, %v527
        %v529 = vrcp.pop %v344
        %v530 = vmul.f32 %v344, %v529
        %v531 = vsub.f32 1.0, %v530
        %v532 = vmul.f32 %v529, %v531
        %v533 = vadd.f32 %v529, %v532
        %vm534 = vweird.f32 %v344
        %vm535 = vweird.f32 %v529
        %vm536 = vmor %vm534, %vm535
        %v537 = vsel %vm536, %v529, %v533
        %v538 = vand.u32 2147483647, %v344
        %vm539 = vcmp.eq.f32.partialorder %v538, 8.507059e+37
        %v540 = vand.u32 %v344, 2147483648
        %v541 = vor.u32 1.1754944e-38, %v540
        %v542 = vsel %vm539, %v541, %v537
        %v543 = vmul.f32 1.0, %v542
        %v544 = vrcp.pop %v345
        %v545 = vmul.f32 %v345, %v544
        %v546 = vsub.f32 1.0, %v545
        %v547 = vmul.f32 %v544, %v546
        %v548 = vadd.f32 %v544, %v547
        %vm549 = vweird.f32 %v345
        %vm550 = vweird.f32 %v544
        %vm551 = vmor %vm549, %vm550
        %v552 = vsel %vm551, %v544, %v548
        %v553 = vand.u32 2147483647, %v345
        %vm554 = vcmp.eq.f32.partialorder %v553, 8.507059e+37
        %v555 = vand.u32 %v345, 2147483648
        %v556 = vor.u32 1.1754944e-38, %v555
        %v557 = vsel %vm554, %v556, %v552
        %v558 = vmul.f32 1.0, %v557
        %v559 = vrcp.pop %v346
        %v560 = vmul.f32 %v346, %v559
        %v561 = vsub.f32 1.0, %v560
        %v562 = vmul.f32 %v559, %v561
        %v563 = vadd.f32 %v559, %v562
        %vm564 = vweird.f32 %v346
        %vm565 = vweird.f32 %v559
        %vm566 = vmor %vm564, %vm565
        %v567 = vsel %vm566, %v559, %v563
        %v568 = vand.u32 2147483647, %v346
        %vm569 = vcmp.eq.f32.partialorder %v568, 8.507059e+37
        %v570 = vand.u32 %v346, 2147483648
        %v571 = vor.u32 1.1754944e-38, %v570
        %v572 = vsel %vm569, %v571, %v567
        %v573 = vmul.f32 1.0, %v572
        %v574 = vrcp.pop %v347
        %v575 = vmul.f32 %v347, %v574
        %v576 = vsub.f32 1.0, %v575
        %v577 = vmul.f32 %v574, %v576
        %v578 = vadd.f32 %v574, %v577
        %vm579 = vweird.f32 %v347
        %vm580 = vweird.f32 %v574
        %vm581 = vmor %vm579, %vm580
        %v582 = vsel %vm581, %v574, %v578
        %v583 = vand.u32 2147483647, %v347
        %vm584 = vcmp.eq.f32.partialorder %v583, 8.507059e+37
        %v585 = vand.u32 %v347, 2147483648
        %v586 = vor.u32 1.1754944e-38, %v585
        %v587 = vsel %vm584, %v586, %v582
        %v588 = vmul.f32 1.0, %v587
        %v589 = vrcp.pop %v348
        %v590 = vmul.f32 %v348, %v589
        %v591 = vsub.f32 1.0, %v590
        %v592 = vmul.f32 %v589, %v591
        %v593 = vadd.f32 %v589, %v592
        %vm594 = vweird.f32 %v348
        %vm595 = vweird.f32 %v589
        %vm596 = vmor %vm594, %vm595
        %v597 = vsel %vm596, %v589, %v593
        %v598 = vand.u32 2147483647, %v348
        %vm599 = vcmp.eq.f32.partialorder %v598, 8.507059e+37
        %v600 = vand.u32 %v348, 2147483648
        %v601 = vor.u32 1.1754944e-38, %v600
        %v602 = vsel %vm599, %v601, %v597
        %v603 = vmul.f32 1.0, %v602
        %v604 = vld [vmem:[%s262] sm:$0xff]
        %v605 = vld [vmem:[%s262 + $0x8] sm:$0xff]
        %v606 = vld [vmem:[%s262 + $0x10] sm:$0xff]
        %v607 = vld [vmem:[%s262 + $0x18] sm:$0xff]
        %v608 = vld [vmem:[%s262 + $0x20] sm:$0xff]
        %v609 = vld [vmem:[%s262 + $0x28] sm:$0xff]
        %v610 = vld [vmem:[%s262 + $0x30] sm:$0xff]
        %v611 = vld [vmem:[%s262 + $0x38] sm:$0xff]
        %v612 = vld [vmem:[%s262 + $0x40] sm:$0xff]
        %v613 = vld [vmem:[%s262 + $0x48] sm:$0xff]
        %v614 = vld [vmem:[%s262 + $0x50] sm:$0xff]
        %v615 = vld [vmem:[%s262 + $0x58] sm:$0xff]
        %v616 = vld [vmem:[%s262 + $0x60] sm:$0xff]
        %v617 = vld [vmem:[%s262 + $0x68] sm:$0xff]
        %v618 = vld [vmem:[%s262 + $0x70] sm:$0xff]
        %v619 = vld [vmem:[%s262 + $0x78] sm:$0xff]
        %v620 = vld [vmem:[%s262 + $0x80] sm:$0x1]
        %v621 = vmul.f32 %v363, %v604
        %v622 = vmul.f32 %v378, %v605
        %v623 = vmul.f32 %v393, %v606
        %v624 = vmul.f32 %v408, %v607
        %v625 = vmul.f32 %v423, %v608
        %v626 = vmul.f32 %v438, %v609
        %v627 = vmul.f32 %v453, %v610
        %v628 = vmul.f32 %v468, %v611
        %v629 = vmul.f32 %v483, %v612
        %v630 = vmul.f32 %v498, %v613
        %v631 = vmul.f32 %v513, %v614
        %v632 = vmul.f32 %v528, %v615
        %v633 = vmul.f32 %v543, %v616
        %v634 = vmul.f32 %v558, %v617
        %v635 = vmul.f32 %v573, %v618
        %v636 = vmul.f32 %v588, %v619
        %v637 = vmul.f32 %v603, %v620
        %v638 = vld [vmem:[%s221] sm:$0xff]
        %v639 = vld [vmem:[%s221 + $0x8] sm:$0xff]
        %v640 = vld [vmem:[%s221 + $0x10] sm:$0xff]
        %v641 = vld [vmem:[%s221 + $0x18] sm:$0xff]
        %v642 = vld [vmem:[%s221 + $0x20] sm:$0xff]
        %v643 = vld [vmem:[%s221 + $0x28] sm:$0xff]
        %v644 = vld [vmem:[%s221 + $0x30] sm:$0xff]
        %v645 = vld [vmem:[%s221 + $0x38] sm:$0xff]
        %vm646 = vcmask 7168
        %v648 = vsel %vm646, %v639, 0
        %v651 = vsel %vm646, %v641, 0
        %v654 = vsel %vm646, %v643, 0
        %v657 = vsel %vm646, %v645, 0
        %vm659 = vcmask 1040384
        %v661 = vsel %vm659, %v637, 0
        %663 = vmatpush.msra.mxu0 %v636
        %664 = vmatpush.msra.mxu0 %v635
        %665 = vmatpush.msra.mxu0 %v634
        %666 = vmatpush.msra.mxu0 %v633
        %667 = vmatpush.msra.mxu0 %v632
        %668 = vmatpush.msra.mxu0 %v631
        %669 = vmatpush.msra.mxu0 %v630
        %670 = vmatpush.msra.mxu0 %v629
        %671 = vmatpush.msra.mxu0 %v628
        %672 = vmatpush.msra.mxu0 %v627
        %673 = vmatpush.msra.mxu0 %v626
        %674 = vmatpush.msra.mxu0 %v625
        %675 = vmatpush.msra.mxu0 %v624
        %676 = vmatpush.msra.mxu0 %v623
        %677 = vmatpush.msra.mxu0 %v622
        %678 = vmatpush.msra.mxu0 %v621
        %679 = vmatmul.f32.gmra.mxu0 %v638
        %v680 = vpop.f32.mrf.mxu0
        %v681 = vadd.f32 0.0, %v680
        %682 = vmatmul.f32.gmra.mxu0 %v640
        %v683 = vpop.f32.mrf.mxu0
        %v684 = vadd.f32 0.0, %v683
        %685 = vmatmul.f32.gmra.mxu0 %v642
        %v686 = vpop.f32.mrf.mxu0
        %v687 = vadd.f32 0.0, %v686
        %688 = vmatmul.f32.gmra.mxu0 %v644
        %v689 = vpop.f32.mrf.mxu0
        %v690 = vadd.f32 0.0, %v689
        %691 = vdwg.mxu0
        %692 = vmatpush.msra.mxu0 0.0
        %693 = vmatpush.msra.mxu0 0.0
        %694 = vmatpush.msra.mxu0 0.0
        %695 = vmatpush.msra.mxu0 0.0
        %696 = vmatpush.msra.mxu0 0.0
        %697 = vmatpush.msra.mxu0 0.0
        %698 = vmatpush.msra.mxu0 0.0
        %699 = vmatpush.msra.mxu0 0.0
        %700 = vmatpush.msra.mxu0 0.0
        %701 = vmatpush.msra.mxu0 0.0
        %702 = vmatpush.msra.mxu0 0.0
        %703 = vmatpush.msra.mxu0 0.0
        %704 = vmatpush.msra.mxu0 0.0
        %705 = vmatpush.msra.mxu0 0.0
        %706 = vmatpush.msra.mxu0 0.0
        %707 = vmatpush.msra.mxu0 %v661
        %708 = vmatmul.f32.gmra.mxu0 %v648
        %v709 = vpop.f32.mrf.mxu0
        %v710 = vadd.f32 %v681, %v709
        %711 = vmatmul.f32.gmra.mxu0 %v651
        %v712 = vpop.f32.mrf.mxu0
        %v713 = vadd.f32 %v684, %v712
        %714 = vmatmul.f32.gmra.mxu0 %v654
        %v715 = vpop.f32.mrf.mxu0
        %v716 = vadd.f32 %v687, %v715
        %717 = vmatmul.f32.gmra.mxu0 %v657
        %v718 = vpop.f32.mrf.mxu0
        %v719 = vadd.f32 %v690, %v718
        %720 = vdwg.mxu0
        %vm721 = vcmask 261120
        %722 = vst.msk [vmem:[%s251] sm:$0xff] %vm721, %v710
        %723 = vst.msk [vmem:[%s251 + $0x8] sm:$0xff] %vm721, %v713
        %724 = vst.msk [vmem:[%s251 + $0x10] sm:$0xff] %vm721, %v716
        %725 = vst.msk [vmem:[%s251 + $0x18] sm:$0xff] %vm721, %v719
        %s726 = sand.u32 %s119, 1
        %s727 = scalar_lea.sflag [#allocation4], %s726
        %s728 = sand.u32 %s119, 1
        %s729 = smul.addr %s728, 32
        %s730 = scalar_lea.vmem [#allocation3], %s729
        // Predicated region
        $region56: #{tpu_custom_call.1} parent=50 // pred_check
          %p731 = pneg %p129
        $region57: #{tpu_custom_call.1} parent=50 // pred_check_branch
          %733 = sbr.rel (%p731) target = $region59
        $region58: #{tpu_custom_call.1} parent=50 // pred_region
          #allocation6 [shape = 'u32[6]{0}', space=smem, size = 0x18, scoped, tag = 'DMA stride descriptor']
          %s734 = smul.u32 2, %s22
          %736 = vsyncadd %s727, 0
          %s737 = smul.addr %s21, 2
          %s738 = smul.addr %s734, 4
          %s739 = sadd.s32 %s737, %s738
          %s740 = smul.addr %s739, 8
          %s741 = scalar_lea.hbm %s3, %s740
          %s743 = sshll.u32 1, 14
          %s744 = sxor.u32 4294967295, %s743
          %s747 = sshll.u32 7, 18
          %s748 = sxor.u32 4294967295, %s747
          %s749 = sand.u32 0, %s748
          %s751 = sor.u32 %s749, 0
          %s752 = sshll.u32 %s730, 4
          %s753 = int_to_ptr.vmem [resolvable:$true] %s752
          %s754 = sshll.u32 %s741, 4
          %s755 = int_to_ptr.hbm [resolvable:$true] %s754
          %761 = sst [smem:[#allocation6]] 256
          %s762 = scalar_lea.smem [#allocation6], 1
          %763 = sst [smem:[%s762]] 512
          %s764 = scalar_lea.smem [#allocation6], 2
          %765 = sst [smem:[%s764]] 2
          %s766 = scalar_lea.smem [#allocation6], 3
          %767 = sst [smem:[%s766]] 128
          %s768 = scalar_lea.smem [#allocation6], 4
          %769 = sst [smem:[%s768]] 128
          %s770 = scalar_lea.smem [#allocation6], 5
          %771 = sst [smem:[%s770]] 8
          %773 = dma.general %s753, 512, %s755, %s727, [#allocation5], [#allocation6], %s751, 0
        $region59: #{tpu_custom_call.1} parent=50 // pred_fallthru
          _
      $region51: #{tpu_custom_call.1} parent=5 // pred_fallthru
        _
      %p774 = scmp.le.s32.totalorder 2, %s12
      // Predicated region
      $region60: #{tpu_custom_call.1} parent=5 // pred_check
        %p775 = pneg %p774
      $region61: #{tpu_custom_call.1} parent=5 // pred_check_branch
        %777 = sbr.rel (%p775) target = $region63
      $region62: #{tpu_custom_call.1} parent=5 // pred_region
        %s778 = ssub.s32 %s12, 2
        // Predicated region
        $region64: #{tpu_custom_call.1} parent=62 // pred_check
          %p779 = pneg %p135
        $region65: #{tpu_custom_call.1} parent=62 // pred_check_branch
          %781 = sbr.rel (%p779) target = $region67
        $region66: #{tpu_custom_call.1} parent=62 // pred_region
          %s782 = sand.u32 %s120, 1
          %s783 = scalar_lea.sflag [#allocation4], %s782
          %s784 = sand.u32 %s120, 1
          %s785 = smul.addr %s784, 32
          %s786 = scalar_lea.vmem [#allocation3], %s785
          %788 = dma.done %s783, 512
        $region67: #{tpu_custom_call.1} parent=62 // pred_fallthru
          _
      $region63: #{tpu_custom_call.1} parent=5 // pred_fallthru
        _
    $region6: #{tpu_custom_call.1} parent=1 // loop_footer
      %s16 = sadd.s32 1, %s12
    $region7: #{tpu_custom_call.1} parent=1 // loop_footer_branch
      %11 = sbr.rel target = $region3
    $region8: #{tpu_custom_call.1} parent=1 // loop_exit
      _
    %789 = vsyncpa [#allocation4], 1
    %s790 = scalar_lea.sflag [#allocation4], 1
    %791 = vsyncpa %s790, 1

</llo_original>
